<compile_context>
chip_gen: v5e
topology: v5e:2x2
jax: 0.10.0
libtpu: 0.0.40
codegen_flags: <defaults>
</compile_context>

<pallas_src>
import jax
import jax.numpy as jnp
import numpy as np
from jax.experimental import pallas as pl
from jax.experimental.pallas import tpu as pltpu


def tca_kernel(x_ref, prev_ref, next_ref, wc_ref, wt_ref, bc_ref, bt_ref, out_ref):
    """One time-tile of Temporal_Channel_Attention.

    x_ref   : (rows, C)  f32  current tile, rows = tile_t * B (time-major, batch-minor)
    prev_ref: (1, B, C)  f32  rows of time step (tile_start - 1), clamped at t = 0
    next_ref: (1, B, C)  f32  rows of time step (tile_end),       clamped at t = T-1
    wc_ref  : (C, C)     f32  1x1 conv weight, transposed to (C_in, C_out)
    wt_ref  : (3, C, 1)  f32  k=3 temporal weight; wt_ref[k] multiplies x[t + k - 1]
    bc_ref  : (1, C)     f32  channel-conv bias
    bt_ref  : (1, 1)     f32  temporal-conv bias
    out_ref : (rows, C)  f32  output tile
    """
    i = pl.program_id(0)
    n = pl.num_programs(0)

    x = x_ref[...]
    rows, _ = x_ref.shape
    B = prev_ref.shape[1]

    # Halo rows.  At the global sequence boundaries the PyTorch convs (pad=1)
    # and AvgPool1d see zero padding, so the clamped halo is masked to zero.
    prev = prev_ref[0] * (i > 0).astype(jnp.float32)           # (B, C)
    nxt = next_ref[0] * (i < n - 1).astype(jnp.float32)        # (B, C)

    # One time step == B rows in the flattened (T*B, C) layout.
    x_prev = jnp.concatenate([prev, x[: rows - B]], axis=0)    # x[t-1]
    x_next = jnp.concatenate([x[B:], nxt], axis=0)             # x[t+1]

    # Channel attention: AvgPool1d(k=3, pad=1, count_include_pad=True) folded
    # into (x_prev + x + x_next)/3, then the 1x1 conv as an MXU matmul.
    pooled = (x_prev + x + x_next) * (1.0 / 3.0)
    c_logit = jnp.dot(pooled, wc_ref[...], preferred_element_type=jnp.float32) + bc_ref[...]
    c_att = jax.nn.sigmoid(c_logit)                            # (rows, C)

    # Temporal attention: Conv1d(C -> 1, k=3, pad=1) as three MXU mat-vecs.
    t_logit = (
        jnp.dot(x_prev, wt_ref[0], preferred_element_type=jnp.float32)
        + jnp.dot(x, wt_ref[1], preferred_element_type=jnp.float32)
        + jnp.dot(x_next, wt_ref[2], preferred_element_type=jnp.float32)
        + bt_ref[...]
    )                                                          # (rows, 1)
    t_att = jax.nn.sigmoid(t_logit)

    # TODO(synk): for production-scale C (e.g. 2048) cast the matmul operands
    # to bf16 (keep preferred_element_type=f32) on v6e/v7x; kept f32 here so
    # the 1e-5 reference check holds.
    out_ref[...] = (x * c_att * t_att).astype(out_ref.dtype)


def _pick_tile_t(T, B, C, budget_bytes):
    """Largest divisor of T whose (tile_t*B, C) f32 block fits the budget and
    keeps the sublane dim a multiple of 8 (or is the full array)."""
    max_rows = max(B, budget_bytes // (C * 4))
    cands = []
    for d in range(1, T + 1):
        if T % d:
            continue
        rows = d * B
        if rows <= max_rows and (rows % 8 == 0 or d == T):
            cands.append(d)
    return max(cands) if cands else T


def temporal_channel_attention(x_tbc, w_t, b_t, w_c, b_c, *, tile_t=None,
                               block_budget_bytes=2 * 1024 * 1024):
    """x_tbc: (T, B, C); params in PyTorch Conv1d shapes:
       w_t (1, C, 3), b_t (1,), w_c (C, C, 1), b_c (C,).  Returns (T, B, C)."""
    T, B, C = x_tbc.shape

    if tile_t is None:
        tile_t = _pick_tile_t(T, B, C, block_budget_bytes)
    assert T % tile_t == 0, "tile_t must divide T"
    rows = tile_t * B
    assert rows % 8 == 0 or tile_t == T, "tile rows must be a multiple of 8 (or tile_t == T)"
    n_tiles = T // tile_t

    x3d = x_tbc.astype(jnp.float32)                 # (T, B, C)  halo source
    x2d = x3d.reshape(T * B, C)                     # free reshape of contiguous dims

    wc = jnp.transpose(w_c[:, :, 0], (1, 0)).astype(jnp.float32)   # (C_in, C_out)
    wt = jnp.transpose(w_t, (2, 1, 0)).astype(jnp.float32)         # (3, C, 1): wt[k,c,0] = w_t[0,c,k]
    bc = b_c.reshape(1, C).astype(jnp.float32)
    bt = b_t.reshape(1, 1).astype(jnp.float32)

    in_specs = [
        # current time tile of the flattened (T*B, C) slab
        pl.BlockSpec((rows, C), lambda i: (i, 0)),
        # halo: the B rows of time step (tile_start - 1), clamped at t = 0
        pl.BlockSpec((1, B, C), lambda i: (jnp.maximum(i * tile_t - 1, 0), 0, 0)),
        # halo: the B rows of time step (tile_end), clamped at t = T - 1
        pl.BlockSpec((1, B, C), lambda i: (jnp.minimum((i + 1) * tile_t, T - 1), 0, 0)),
        # parameters: constant index maps -> DMA'd once, VMEM-resident
        pl.BlockSpec((C, C), lambda i: (0, 0)),
        pl.BlockSpec((3, C, 1), lambda i: (0, 0, 0)),
        pl.BlockSpec((1, C), lambda i: (0, 0)),
        pl.BlockSpec((1, 1), lambda i: (0, 0)),
    ]
    out_specs = pl.BlockSpec((rows, C), lambda i: (i, 0))

    out2d = pl.pallas_call(
        tca_kernel,
        out_shape=jax.ShapeDtypeStruct((T * B, C), jnp.float32),
        grid=(n_tiles,),
        in_specs=in_specs,
        out_specs=out_specs,
        compiler_params=pltpu.CompilerParams(
            # Independent time tiles -> shard across the 2 TensorCores on v7x.
            dimension_semantics=("parallel",),
            # Explicit scoped-VMEM cap: fits v7x's 64 MiB and v5e/v6e's 128 MiB.
            vmem_limit_bytes=48 * 1024 * 1024,
        ),
    )(x2d, x3d, x3d, wc, wt, bc, bt)

    return out2d.reshape(T, B, C)


def ref_forward(x_tbc, w_t, b_t, w_c, b_c):
    """Pure-JAX reference mirroring the PyTorch module exactly."""
    x = jnp.transpose(x_tbc, (1, 2, 0))                       # (B, C, T)
    B, C, T = x.shape
    xp = jnp.pad(x, ((0, 0), (0, 0), (1, 1)))
    t_logit = jnp.zeros((B, T), jnp.float32)
    for k in range(3):
        t_logit = t_logit + jnp.einsum("bct,c->bt", xp[:, :, k:k + T], w_t[0, :, k])
    t_att = jax.nn.sigmoid(t_logit + b_t[0])[:, None, :]      # (B, 1, T)
    pooled = (xp[:, :, 0:T] + xp[:, :, 1:T + 1] + xp[:, :, 2:T + 2]) / 3.0
    c_logit = jnp.einsum("oc,bct->bot", w_c[:, :, 0], pooled) + b_c[None, :, None]
    c_att = jax.nn.sigmoid(c_logit)
    out = x * (t_att * c_att)
    return jnp.transpose(out, (2, 0, 1))                      # (T, B, C)


def _make_params(key, C):
    k1, k2, k3, k4 = jax.random.split(key, 4)
    w_t = jax.random.normal(k1, (1, C, 3), dtype=jnp.float32) * 0.1
    b_t = jax.random.normal(k2, (1,), dtype=jnp.float32) * 0.1
    w_c = jax.random.normal(k3, (C, C, 1), dtype=jnp.float32) * 0.1
    b_c = jax.random.normal(k4, (C,), dtype=jnp.float32) * 0.1
    return w_t, b_t, w_c, b_c


if __name__ == "__main__":
    key = jax.random.PRNGKey(0)

    # --- Test 1: toy shape from the module (seq=16, batch=2, len_feature=32) ---
    T, B, C = 16, 2, 32
    kx, kp = jax.random.split(key)
    x = jax.random.normal(kx, (T, B, C), dtype=jnp.float32)
    w_t, b_t, w_c, b_c = _make_params(kp, C)

    ref = jax.block_until_ready(ref_forward(x, w_t, b_t, w_c, b_c))

    # Auto tile selection (single tile at this small size).
    out = jax.block_until_ready(temporal_channel_attention(x, w_t, b_t, w_c, b_c))
    assert out.shape == (T, B, C)
    np.testing.assert_allclose(np.asarray(out), np.asarray(ref), rtol=1e-5, atol=1e-5)

    # Forced multi-tile path: exercises the pipelined grid + time-halo handling.
    out_tiled = jax.block_until_ready(
        temporal_channel_attention(x, w_t, b_t, w_c, b_c, tile_t=4))
    np.testing.assert_allclose(np.asarray(out_tiled), np.asarray(ref), rtol=1e-5, atol=1e-5)

    # --- Test 2: lane-dense path (C multiple of 128), multi-tile grid ---
    T2, B2, C2 = 8, 4, 128
    kx2, kp2 = jax.random.split(kp)
    x2 = jax.random.normal(kx2, (T2, B2, C2), dtype=jnp.float32)
    w_t2, b_t2, w_c2, b_c2 = _make_params(kp2, C2)
    ref2 = jax.block_until_ready(ref_forward(x2, w_t2, b_t2, w_c2, b_c2))
    out2 = jax.block_until_ready(
        temporal_channel_attention(x2, w_t2, b_t2, w_c2, b_c2, tile_t=2))
    np.testing.assert_allclose(np.asarray(out2), np.asarray(ref2), rtol=1e-5, atol=1e-5)

    print("KERNEL_OK")
</pallas_src>

<mosaic_0001>
module attributes {stable_mosaic.version = 11 : i64} {
  func.func @tca_kernel(%arg0: i32, %arg1: memref<32x32xf32, #tpu.memory_space<vmem>>, %arg2: memref<1x2x32xf32, #tpu.memory_space<vmem>>, %arg3: memref<1x2x32xf32, #tpu.memory_space<vmem>>, %arg4: memref<32x32xf32, #tpu.memory_space<vmem>>, %arg5: memref<3x32x1xf32, #tpu.memory_space<vmem>>, %arg6: memref<1x32xf32, #tpu.memory_space<vmem>>, %arg7: memref<1x1xf32, #tpu.memory_space<vmem>>, %arg8: memref<32x32xf32, #tpu.memory_space<vmem>>) attributes {dimension_semantics = [#tpu.dimension_semantics<parallel>], iteration_bounds = array<i64: 1>, scalar_prefetch = 0 : i64, scratch_operands = 0 : i64, tpu.core_type = #tpu.core_type<tc>, window_params = [{transform_indices = @transform_0, window_bounds = array<i64: 32, 32>}, {transform_indices = @transform_1, window_bounds = array<i64: 1, 2, 32>}, {transform_indices = @transform_2, window_bounds = array<i64: 1, 2, 32>}, {pipeline_mode = #tpu.pipeline_mode<synchronous>, transform_indices = @transform_3, window_bounds = array<i64: 32, 32>}, {pipeline_mode = #tpu.pipeline_mode<synchronous>, transform_indices = @transform_4, window_bounds = array<i64: 3, 32, 1>}, {pipeline_mode = #tpu.pipeline_mode<synchronous>, transform_indices = @transform_5, window_bounds = array<i64: 1, 32>}, {pipeline_mode = #tpu.pipeline_mode<synchronous>, transform_indices = @transform_6, window_bounds = array<i64: 1, 1>}, {transform_indices = @transform_7, window_bounds = array<i64: 32, 32>}]} {
    %c0 = arith.constant 0 : index
    %c0_0 = arith.constant 0 : index
    %0 = vector.load %arg1[%c0, %c0_0] : memref<32x32xf32, #tpu.memory_space<vmem>>, vector<32x32xf32>
    %c0_1 = arith.constant 0 : index
    %c0_2 = arith.constant 0 : index
    %c0_3 = arith.constant 0 : index
    %1 = vector.load %arg2[%c0_1, %c0_2, %c0_3] : memref<1x2x32xf32, #tpu.memory_space<vmem>>, vector<1x2x32xf32>
    %2 = vector.shape_cast %1 : vector<1x2x32xf32> to vector<2x32xf32>
    %c0_i32 = arith.constant 0 : i32
    %3 = arith.cmpi sgt, %arg0, %c0_i32 : i32
    %4 = arith.extui %3 : i1 to i32
    %5 = arith.sitofp %4 : i32 to f32
    %6 = vector.broadcast %5 : f32 to vector<2x32xf32>
    %7 = arith.mulf %2, %6 : vector<2x32xf32>
    %c0_4 = arith.constant 0 : index
    %c0_5 = arith.constant 0 : index
    %c0_6 = arith.constant 0 : index
    %8 = vector.load %arg3[%c0_4, %c0_5, %c0_6] : memref<1x2x32xf32, #tpu.memory_space<vmem>>, vector<1x2x32xf32>
    %9 = vector.shape_cast %8 : vector<1x2x32xf32> to vector<2x32xf32>
    %c0_i32_7 = arith.constant 0 : i32
    %10 = arith.cmpi slt, %arg0, %c0_i32_7 : i32
    %11 = arith.extui %10 : i1 to i32
    %12 = arith.sitofp %11 : i32 to f32
    %13 = vector.broadcast %12 : f32 to vector<2x32xf32>
    %14 = arith.mulf %9, %13 : vector<2x32xf32>
    %15 = vector.extract_strided_slice %0 {offsets = [0, 0], sizes = [30, 32], strides = [1, 1]} : vector<32x32xf32> to vector<30x32xf32>
    %16 = tpu.concatenate %7, %15 in 0 : vector<2x32xf32>, vector<30x32xf32> -> vector<32x32xf32>
    %17 = vector.extract_strided_slice %0 {offsets = [2, 0], sizes = [30, 32], strides = [1, 1]} : vector<32x32xf32> to vector<30x32xf32>
    %18 = tpu.concatenate %17, %14 in 0 : vector<30x32xf32>, vector<2x32xf32> -> vector<32x32xf32>
    %19 = arith.addf %16, %0 : vector<32x32xf32>
    %20 = arith.addf %19, %18 : vector<32x32xf32>
    %cst = arith.constant 0.333333343 : f32
    %21 = vector.broadcast %cst : f32 to vector<32x32xf32>
    %22 = arith.mulf %20, %21 : vector<32x32xf32>
    %c0_8 = arith.constant 0 : index
    %c0_9 = arith.constant 0 : index
    %23 = vector.load %arg4[%c0_8, %c0_9] : memref<32x32xf32, #tpu.memory_space<vmem>>, vector<32x32xf32>
    %cst_10 = arith.constant dense<0.000000e+00> : vector<32x32xf32>
    %24 = tpu.matmul %22, %23, %cst_10 {dimension_numbers = #tpu.dot_dimension_numbers<[1], [0], [0], [1], [0, 0, 1, 1], [], []>} : vector<32x32xf32>, vector<32x32xf32>, vector<32x32xf32> -> vector<32x32xf32>
    %c0_11 = arith.constant 0 : index
    %c0_12 = arith.constant 0 : index
    %25 = vector.load %arg6[%c0_11, %c0_12] : memref<1x32xf32, #tpu.memory_space<vmem>>, vector<1x32xf32>
    %26 = vector.broadcast %25 : vector<1x32xf32> to vector<32x32xf32>
    %27 = arith.addf %24, %26 : vector<32x32xf32>
    %28 = arith.negf %27 : vector<32x32xf32>
    %29 = math.exp %28 : vector<32x32xf32>
    %cst_13 = arith.constant 1.000000e+00 : f32
    %30 = vector.broadcast %cst_13 : f32 to vector<32x32xf32>
    %31 = arith.addf %30, %29 : vector<32x32xf32>
    %32 = arith.divf %30, %31 : vector<32x32xf32>
    %c0_14 = arith.constant 0 : index
    %c0_15 = arith.constant 0 : index
    %c0_16 = arith.constant 0 : index
    %33 = vector.load %arg5[%c0_14, %c0_15, %c0_16] : memref<3x32x1xf32, #tpu.memory_space<vmem>>, vector<1x32x1xf32>
    %34 = vector.shape_cast %33 : vector<1x32x1xf32> to vector<32x1xf32>
    %cst_17 = arith.constant dense<0.000000e+00> : vector<32x1xf32>
    %35 = tpu.matmul %16, %34, %cst_17 {dimension_numbers = #tpu.dot_dimension_numbers<[1], [0], [0], [1], [0, 0, 1, 1], [], []>} : vector<32x32xf32>, vector<32x1xf32>, vector<32x1xf32> -> vector<32x1xf32>
    %c1 = arith.constant 1 : index
    %c0_18 = arith.constant 0 : index
    %c0_19 = arith.constant 0 : index
    %36 = vector.load %arg5[%c1, %c0_18, %c0_19] : memref<3x32x1xf32, #tpu.memory_space<vmem>>, vector<1x32x1xf32>
    %37 = vector.shape_cast %36 : vector<1x32x1xf32> to vector<32x1xf32>
    %cst_20 = arith.constant dense<0.000000e+00> : vector<32x1xf32>
    %38 = tpu.matmul %0, %37, %cst_20 {dimension_numbers = #tpu.dot_dimension_numbers<[1], [0], [0], [1], [0, 0, 1, 1], [], []>} : vector<32x32xf32>, vector<32x1xf32>, vector<32x1xf32> -> vector<32x1xf32>
    %39 = arith.addf %35, %38 : vector<32x1xf32>
    %c2 = arith.constant 2 : index
    %c0_21 = arith.constant 0 : index
    %c0_22 = arith.constant 0 : index
    %40 = vector.load %arg5[%c2, %c0_21, %c0_22] : memref<3x32x1xf32, #tpu.memory_space<vmem>>, vector<1x32x1xf32>
    %41 = vector.shape_cast %40 : vector<1x32x1xf32> to vector<32x1xf32>
    %cst_23 = arith.constant dense<0.000000e+00> : vector<32x1xf32>
    %42 = tpu.matmul %18, %41, %cst_23 {dimension_numbers = #tpu.dot_dimension_numbers<[1], [0], [0], [1], [0, 0, 1, 1], [], []>} : vector<32x32xf32>, vector<32x1xf32>, vector<32x1xf32> -> vector<32x1xf32>
    %43 = arith.addf %39, %42 : vector<32x1xf32>
    %c0_24 = arith.constant 0 : index
    %c0_25 = arith.constant 0 : index
    %44 = vector.load %arg7[%c0_24, %c0_25] : memref<1x1xf32, #tpu.memory_space<vmem>>, vector<1x1xf32>
    %45 = vector.broadcast %44 : vector<1x1xf32> to vector<32x1xf32>
    %46 = arith.addf %43, %45 : vector<32x1xf32>
    %47 = arith.negf %46 : vector<32x1xf32>
    %48 = math.exp %47 : vector<32x1xf32>
    %cst_26 = arith.constant 1.000000e+00 : f32
    %49 = vector.broadcast %cst_26 : f32 to vector<32x1xf32>
    %50 = arith.addf %49, %48 : vector<32x1xf32>
    %51 = arith.divf %49, %50 : vector<32x1xf32>
    %52 = arith.mulf %0, %32 : vector<32x32xf32>
    %53 = vector.broadcast %51 : vector<32x1xf32> to vector<32x32xf32>
    %54 = arith.mulf %52, %53 : vector<32x32xf32>
    %c0_27 = arith.constant 0 : index
    %c0_28 = arith.constant 0 : index
    %55 = vector.load %arg8[%c0_27, %c0_28] : memref<32x32xf32, #tpu.memory_space<vmem>>, vector<32x32xf32>
    tpu.vector_store %arg8[%c0_27, %c0_28], %54 {strides = array<i32>} : memref<32x32xf32, #tpu.memory_space<vmem>>, vector<32x32xf32>,
    return
  }
  func.func @transform_0(%arg0: i32) -> (i32, i32) {
    %c0_i32 = arith.constant 0 : i32
    %c0_i32_0 = arith.constant 0 : i32
    return %arg0, %c0_i32 : i32, i32
  }
  func.func @transform_1(%arg0: i32) -> (i32, i32, i32) {
    %c16_i32 = arith.constant 16 : i32
    %0 = arith.muli %arg0, %c16_i32 : i32
    %c1_i32 = arith.constant 1 : i32
    %1 = arith.subi %0, %c1_i32 : i32
    %c0_i32 = arith.constant 0 : i32
    %2 = arith.maxsi %1, %c0_i32 : i32
    %c0_i32_0 = arith.constant 0 : i32
    %c0_i32_1 = arith.constant 0 : i32
    %c0_i32_2 = arith.constant 0 : i32
    return %2, %c0_i32_0, %c0_i32_1 : i32, i32, i32
  }
  func.func @transform_2(%arg0: i32) -> (i32, i32, i32) {
    %c1_i32 = arith.constant 1 : i32
    %0 = arith.addi %arg0, %c1_i32 : i32
    %c16_i32 = arith.constant 16 : i32
    %1 = arith.muli %0, %c16_i32 : i32
    %c15_i32 = arith.constant 15 : i32
    %2 = arith.minsi %1, %c15_i32 : i32
    %c0_i32 = arith.constant 0 : i32
    %c0_i32_0 = arith.constant 0 : i32
    %c0_i32_1 = arith.constant 0 : i32
    return %2, %c0_i32, %c0_i32_0 : i32, i32, i32
  }
  func.func @transform_3(%arg0: i32) -> (i32, i32) {
    %c0_i32 = arith.constant 0 : i32
    %c0_i32_0 = arith.constant 0 : i32
    %c0_i32_1 = arith.constant 0 : i32
    return %c0_i32, %c0_i32_0 : i32, i32
  }
  func.func @transform_4(%arg0: i32) -> (i32, i32, i32) {
    %c0_i32 = arith.constant 0 : i32
    %c0_i32_0 = arith.constant 0 : i32
    %c0_i32_1 = arith.constant 0 : i32
    %c0_i32_2 = arith.constant 0 : i32
    return %c0_i32, %c0_i32_0, %c0_i32_1 : i32, i32, i32
  }
  func.func @transform_5(%arg0: i32) -> (i32, i32) {
    %c0_i32 = arith.constant 0 : i32
    %c0_i32_0 = arith.constant 0 : i32
    %c0_i32_1 = arith.constant 0 : i32
    return %c0_i32, %c0_i32_0 : i32, i32
  }
  func.func @transform_6(%arg0: i32) -> (i32, i32) {
    %c0_i32 = arith.constant 0 : i32
    %c0_i32_0 = arith.constant 0 : i32
    %c0_i32_1 = arith.constant 0 : i32
    return %c0_i32, %c0_i32_0 : i32, i32
  }
  func.func @transform_7(%arg0: i32) -> (i32, i32) {
    %c0_i32 = arith.constant 0 : i32
    %c0_i32_0 = arith.constant 0 : i32
    return %arg0, %c0_i32 : i32, i32
  }
}

</mosaic_0001>

<llo_original>
// kernel: tpu_custom_call.1
$region0: #{tpu_custom_call.1}
  #allocation0 [shape = 'u32[]', space=smem, size = 0x4, offset = 0x4, fixed_abs, tag = 'smem constant byte address 0x4 - core index']
  #allocation1 [shape = 'u32[72,128]{1,0:T(1,128)}', space=vmem, size = 0x9000, scoped, tag = 'internal scratch']
  #allocation2 [shape = 'f32[1,1]{1,0:T(1,128)S(1)}', space=vmem, size = 0x200, scoped, tag = 'scoped memory for tpu_custom_call.1']
  %s0 = inlined_call_operand.vmem [shape: f32[32,32], index: 0, kind: input, shape index: {}]
  %s1 = inlined_call_operand.vmem [shape: f32[16,2,32], index: 1, kind: input, shape index: {}]
  %s2 = inlined_call_operand.vmem [shape: f32[16,2,32], index: 2, kind: input, shape index: {}]
  %s3 = inlined_call_operand.hbm [shape: f32[32,32], index: 3, kind: input, shape index: {}]
  %s4 = inlined_call_operand.vmem [shape: f32[3,32,1], index: 4, kind: input, shape index: {}]
  %s5 = inlined_call_operand.vmem [shape: f32[1,32], index: 5, kind: input, shape index: {}]
  %s6 = inlined_call_operand.<no memory space> [shape: f32[1,1], index: 6, kind: input, shape index: {}]
  %s7 = inlined_call_operand.hbm [shape: f32[32,32], index: 7, kind: output, shape index: {}]
  %s8 = sld [smem:[#allocation0]]
  $region42: #{tpu_custom_call.1} parent=0
    _
  %s10 = ssub.s32 1, %s8
  %s11 = scalar_select 0, %s10, %s8
  %v12 = vstv %s6
  %13 = vst [vmem:[#allocation2] sm:$0x1] %v12
  $region1: #{tpu_custom_call.1} parent=0
    #allocation3 [shape = 'u8[16384]{0}', space=vmem, size = 0x4000, scoped, tag = 'input window, operand 3, single buffered']
    #allocation4 [shape = 's32[1]{0}', space=sflag, size = 0x4, scoped, tag = 'scoped memory for tpu_custom_call.1']
    #allocation5 [shape = 's32[1]{0}', space=sflag, size = 0x4, scoped, tag = 'scoped memory for tpu_custom_call.1']
    #allocation6 [shape = 'u8[16384]{0}', space=vmem, size = 0x4000, scoped, tag = 'output window, operand 0, single buffered']
    %14 = vsyncpa [#allocation4], 0
    %15 = vsyncpa [#allocation5], 0
    // Predicated region
    $region2: #{tpu_custom_call.1} parent=1 // pred_check
      _
    $region3: #{tpu_custom_call.1} parent=1 // pred_check_branch
      %17 = sbr.rel (0) target = $region5
    $region4: #{tpu_custom_call.1} parent=1 // pred_region
      _
    $region5: #{tpu_custom_call.1} parent=1 // pred_fallthru
      _
    // Predicated region
    $region6: #{tpu_custom_call.1} parent=1 // pred_check
      _
    $region7: #{tpu_custom_call.1} parent=1 // pred_check_branch
      %19 = sbr.rel (0) target = $region9
    $region8: #{tpu_custom_call.1} parent=1 // pred_region
      %s20 = smul.u32 0, 16
      %s21 = ssub.s32 %s20, 1
      %p22 = scmp.gt.s32.totalorder %s21, 0
      %s23 = scalar_select %p22, %s21, 0
      %p24 = scmp.lt.s32.totalorder %s23, 15
      %s25 = scalar_select %p24, %s23, 15
      %s26 = smul.addr %s25, 2
      %s27 = scalar_lea.vmem %s1, %s26
      %s28 = smul.u32 0, 16
      %s29 = ssub.s32 %s28, 1
      %p30 = scmp.gt.s32.totalorder %s29, 0
      %s31 = scalar_select %p30, %s29, 0
    $region9: #{tpu_custom_call.1} parent=1 // pred_fallthru
      _
    // Predicated region
    $region10: #{tpu_custom_call.1} parent=1 // pred_check
      _
    $region11: #{tpu_custom_call.1} parent=1 // pred_check_branch
      %33 = sbr.rel (0) target = $region13
    $region12: #{tpu_custom_call.1} parent=1 // pred_region
      %s34 = sadd.s32 0, 1
      %s35 = smul.u32 %s34, 16
      %p36 = scmp.lt.s32.totalorder %s35, 15
      %s37 = scalar_select %p36, %s35, 15
      %p38 = scmp.lt.s32.totalorder %s37, 15
      %s39 = scalar_select %p38, %s37, 15
      %s40 = smul.addr %s39, 2
      %s41 = scalar_lea.vmem %s2, %s40
      %s42 = sadd.s32 0, 1
      %s43 = smul.u32 %s42, 16
      %p44 = scmp.lt.s32.totalorder %s43, 15
      %s45 = scalar_select %p44, %s43, 15
    $region13: #{tpu_custom_call.1} parent=1 // pred_fallthru
      _
    // Predicated region
    $region14: #{tpu_custom_call.1} parent=1 // pred_check
      _
    $region15: #{tpu_custom_call.1} parent=1 // pred_check_branch
      %47 = sbr.rel (0) target = $region17
    $region16: #{tpu_custom_call.1} parent=1 // pred_region
      %49 = vsyncadd [#allocation4], 0
      %s50 = sshll.u32 %s3, 4
      %s51 = int_to_ptr.hbm [resolvable:$true] %s50
      %s52 = sshll.u32 [#allocation3], 4
      %s53 = int_to_ptr.vmem [resolvable:$true] %s52
      %58 = dma.hbm_to_vmem [thread:$0]  %s51, 512, %s53, [#allocation4], 128, 128, 8
    $region17: #{tpu_custom_call.1} parent=1 // pred_fallthru
      _
    // Predicated region
    $region18: #{tpu_custom_call.1} parent=1 // pred_check
      _
    $region19: #{tpu_custom_call.1} parent=1 // pred_check_branch
      %60 = sbr.rel (0) target = $region21
    $region20: #{tpu_custom_call.1} parent=1 // pred_region
      _
    $region21: #{tpu_custom_call.1} parent=1 // pred_fallthru
      _
    // Predicated region
    $region22: #{tpu_custom_call.1} parent=1 // pred_check
      _
    $region23: #{tpu_custom_call.1} parent=1 // pred_check_branch
      %62 = sbr.rel (0) target = $region25
    $region24: #{tpu_custom_call.1} parent=1 // pred_region
      _
    $region25: #{tpu_custom_call.1} parent=1 // pred_fallthru
      _
    // Predicated region
    $region26: #{tpu_custom_call.1} parent=1 // pred_check
      _
    $region27: #{tpu_custom_call.1} parent=1 // pred_check_branch
      %64 = sbr.rel (0) target = $region29
    $region28: #{tpu_custom_call.1} parent=1 // pred_region
      _
    $region29: #{tpu_custom_call.1} parent=1 // pred_fallthru
      _
    // Predicated region
    $region30: #{tpu_custom_call.1} parent=1 // pred_check
      _
    $region31: #{tpu_custom_call.1} parent=1 // pred_check_branch
      %66 = sbr.rel (0) target = $region33
    $region32: #{tpu_custom_call.1} parent=1 // pred_region
      %68 = dma.done [#allocation4], 512
    $region33: #{tpu_custom_call.1} parent=1 // pred_fallthru
      _
    %s69 = smul.u32 0, 16
    %s70 = ssub.s32 %s69, 1
    %p71 = scmp.gt.s32.totalorder %s70, 0
    %s72 = scalar_select %p71, %s70, 0
    %p73 = scmp.lt.s32.totalorder %s72, 15
    %s74 = scalar_select %p73, %s72, 15
    %s75 = smul.addr %s74, 2
    %s76 = scalar_lea.vmem %s1, %s75
    %s77 = sadd.s32 0, 1
    %s78 = smul.u32 %s77, 16
    %p79 = scmp.lt.s32.totalorder %s78, 15
    %s80 = scalar_select %p79, %s78, 15
    %p81 = scmp.lt.s32.totalorder %s80, 15
    %s82 = scalar_select %p81, %s80, 15
    %s83 = smul.addr %s82, 2
    %s84 = scalar_lea.vmem %s2, %s83
    %s85 = smul.u32 0, 16
    %s86 = ssub.s32 %s85, 1
    %p87 = scmp.gt.s32.totalorder %s86, 0
    %s88 = scalar_select %p87, %s86, 0
    %p89 = scmp.lt.s32.totalorder %s88, 15
    %s90 = scalar_select %p89, %s88, 15
    %s91 = smul.addr %s90, 2
    %s92 = scalar_lea.vmem %s1, %s91
    %s93 = smul.u32 0, 16
    %s94 = ssub.s32 %s93, 1
    %p95 = scmp.gt.s32.totalorder %s94, 0
    %s96 = scalar_select %p95, %s94, 0
    %s97 = sadd.s32 0, 1
    %s98 = smul.u32 %s97, 16
    %p99 = scmp.lt.s32.totalorder %s98, 15
    %s100 = scalar_select %p99, %s98, 15
    %p101 = scmp.lt.s32.totalorder %s100, 15
    %s102 = scalar_select %p101, %s100, 15
    %s103 = smul.addr %s102, 2
    %s104 = scalar_lea.vmem %s2, %s103
    %s105 = sadd.s32 0, 1
    %s106 = smul.u32 %s105, 16
    %p107 = scmp.lt.s32.totalorder %s106, 15
    %s108 = scalar_select %p107, %s106, 15
    %v109 = vld [vmem:[%s0] sm:$0xff]
    %v110 = vld [vmem:[%s0 + $0x8] sm:$0xff]
    %v111 = vld [vmem:[%s0 + $0x10] sm:$0xff]
    %v112 = vld [vmem:[%s0 + $0x18] sm:$0xff]
    %v113 = vld [vmem:[%s92] sm:$0x3]
    %p114 = scmp.gt.s32.totalorder 0, 0
    %s115 = scalar_select %p114, 1, 0
    %s116 = scvt.s32.f32 %s115
    %v117 = vstv %s116
    %v118 = vmul.f32 %v113, %v117
    %v119 = vld [vmem:[%s104] sm:$0x3]
    %p120 = scmp.lt.s32.totalorder 0, 0
    %s121 = scalar_select %p120, 1, 0
    %s122 = scvt.s32.f32 %s121
    %v123 = vstv %s122
    %v124 = vmul.f32 %v119, %v123
    %vm129 = vcmask 1041408
    %v130 = vrot.slane %v109, 6
    %v131 = vrot.slane %v110, 6
    %v132 = vsel %vm129, %v130, %v131
    %v133 = vrot.slane %v111, 6
    %v134 = vsel %vm129, %v131, %v133
    %v135 = vrot.slane %v112, 6
    %v136 = vsel %vm129, %v133, %v135
    %v141 = vsel %vm129, %v118, %v130
    %vm142 = vcmask 1045504
    %v143 = vrot.slane %v109, 2
    %v144 = vrot.slane %v110, 2
    %v145 = vsel %vm142, %v143, %v144
    %v146 = vrot.slane %v111, 2
    %v147 = vsel %vm142, %v144, %v146
    %v148 = vrot.slane %v112, 2
    %v149 = vsel %vm142, %v146, %v148
    %v155 = vrot.slane %v124, 2
    %v157 = vsel %vm142, %v148, %v155
    %v158 = vadd.f32 %v141, %v109
    %v159 = vadd.f32 %v132, %v110
    %v160 = vadd.f32 %v134, %v111
    %v161 = vadd.f32 %v136, %v112
    %v162 = vadd.f32 %v158, %v145
    %v163 = vadd.f32 %v159, %v147
    %v164 = vadd.f32 %v160, %v149
    %v165 = vadd.f32 %v161, %v157
    %v166 = vmul.f32 %v162, 0.33333334
    %v167 = vmul.f32 %v163, 0.33333334
    %v168 = vmul.f32 %v164, 0.33333334
    %v169 = vmul.f32 %v165, 0.33333334
    %v170 = vld [vmem:[#allocation3] sm:$0xff]
    %v171 = vld [vmem:[#allocation3 + $0x8] sm:$0xff]
    %v172 = vld [vmem:[#allocation3 + $0x10] sm:$0xff]
    %v173 = vld [vmem:[#allocation3 + $0x18] sm:$0xff]
    %v174 = vld [vmem:[%s5] sm:$0x1]
    %v176 = vperm.slane %v174, 0
    %vm178 = vcmask 261120
    %v180 = vsel %vm178, %v166, 0
    %v183 = vsel %vm178, %v167, 0
    %v186 = vsel %vm178, %v168, 0
    %v189 = vsel %vm178, %v169, 0
    %191 = vmatpush.msra.mxu0 0.0
    %192 = vmatpush.msra.mxu0 0.0
    %193 = vmatpush.msra.mxu0 0.0
    %194 = vmatpush.msra.mxu0 0.0
    %195 = vmatpush.msra.mxu0 0.0
    %196 = vmatpush.msra.mxu0 0.0
    %197 = vmatpush.msra.mxu0 0.0
    %198 = vmatpush.msra.mxu0 0.0
    %199 = vmatpush.msra.mxu0 0.0
    %200 = vmatpush.msra.mxu0 0.0
    %201 = vmatpush.msra.mxu0 0.0
    %202 = vmatpush.msra.mxu0 0.0
    %203 = vmatpush.msra.mxu0 %v173
    %204 = vmatpush.msra.mxu0 %v172
    %205 = vmatpush.msra.mxu0 %v171
    %206 = vmatpush.msra.mxu0 %v170
    %207 = vmatmul.f32.gmra.mxu0 %v180
    %v208 = vpop.f32.mrf.mxu0
    %v209 = vadd.f32 %v176, %v208
    %210 = vmatmul.f32.gmra.mxu0 %v183
    %v211 = vpop.f32.mrf.mxu0
    %v212 = vadd.f32 %v176, %v211
    %213 = vmatmul.f32.gmra.mxu0 %v186
    %v214 = vpop.f32.mrf.mxu0
    %v215 = vadd.f32 %v176, %v214
    %216 = vmatmul.f32.gmra.mxu0 %v189
    %v217 = vpop.f32.mrf.mxu0
    %v218 = vadd.f32 %v176, %v217
    %219 = vdwg.mxu0
    %v220 = vxor.u32 %v209, 2147483648
    %v221 = vxor.u32 %v212, 2147483648
    %v222 = vxor.u32 %v215, 2147483648
    %v223 = vxor.u32 %v218, 2147483648
    %v224 = vmul.f32 %v220, 1.442695
    %v225 = vpow.pop %v224
    %v226 = vmul.f32 %v221, 1.442695
    %v227 = vpow.pop %v226
    %v228 = vmul.f32 %v222, 1.442695
    %v229 = vpow.pop %v228
    %v230 = vmul.f32 %v223, 1.442695
    %v231 = vpow.pop %v230
    %v232 = vadd.f32 %v225, 1.0
    %v233 = vadd.f32 %v227, 1.0
    %v234 = vadd.f32 %v229, 1.0
    %v235 = vadd.f32 %v231, 1.0
    %v236 = vrcp.pop %v232
    %v237 = vmul.f32 %v232, %v236
    %v238 = vsub.f32 1.0, %v237
    %v239 = vmul.f32 %v236, %v238
    %v240 = vadd.f32 %v236, %v239
    %vm241 = vweird.f32 %v232
    %vm242 = vweird.f32 %v236
    %vm243 = vmor %vm241, %vm242
    %v244 = vsel %vm243, %v236, %v240
    %v245 = vand.u32 2147483647, %v232
    %vm246 = vcmp.eq.f32.partialorder %v245, 8.507059e+37
    %v247 = vand.u32 %v232, 2147483648
    %v248 = vor.u32 1.1754944e-38, %v247
    %v249 = vsel %vm246, %v248, %v244
    %v250 = vmul.f32 1.0, %v249
    %v251 = vrcp.pop %v233
    %v252 = vmul.f32 %v233, %v251
    %v253 = vsub.f32 1.0, %v252
    %v254 = vmul.f32 %v251, %v253
    %v255 = vadd.f32 %v251, %v254
    %vm256 = vweird.f32 %v233
    %vm257 = vweird.f32 %v251
    %vm258 = vmor %vm256, %vm257
    %v259 = vsel %vm258, %v251, %v255
    %v260 = vand.u32 2147483647, %v233
    %vm261 = vcmp.eq.f32.partialorder %v260, 8.507059e+37
    %v262 = vand.u32 %v233, 2147483648
    %v263 = vor.u32 1.1754944e-38, %v262
    %v264 = vsel %vm261, %v263, %v259
    %v265 = vmul.f32 1.0, %v264
    %v266 = vrcp.pop %v234
    %v267 = vmul.f32 %v234, %v266
    %v268 = vsub.f32 1.0, %v267
    %v269 = vmul.f32 %v266, %v268
    %v270 = vadd.f32 %v266, %v269
    %vm271 = vweird.f32 %v234
    %vm272 = vweird.f32 %v266
    %vm273 = vmor %vm271, %vm272
    %v274 = vsel %vm273, %v266, %v270
    %v275 = vand.u32 2147483647, %v234
    %vm276 = vcmp.eq.f32.partialorder %v275, 8.507059e+37
    %v277 = vand.u32 %v234, 2147483648
    %v278 = vor.u32 1.1754944e-38, %v277
    %v279 = vsel %vm276, %v278, %v274
    %v280 = vmul.f32 1.0, %v279
    %v281 = vrcp.pop %v235
    %v282 = vmul.f32 %v235, %v281
    %v283 = vsub.f32 1.0, %v282
    %v284 = vmul.f32 %v281, %v283
    %v285 = vadd.f32 %v281, %v284
    %vm286 = vweird.f32 %v235
    %vm287 = vweird.f32 %v281
    %vm288 = vmor %vm286, %vm287
    %v289 = vsel %vm288, %v281, %v285
    %v290 = vand.u32 2147483647, %v235
    %vm291 = vcmp.eq.f32.partialorder %v290, 8.507059e+37
    %v292 = vand.u32 %v235, 2147483648
    %v293 = vor.u32 1.1754944e-38, %v292
    %v294 = vsel %vm291, %v293, %v289
    %v295 = vmul.f32 1.0, %v294
    %v296 = vld [vmem:[%s4] sm:$0xff]
    %v297 = vld [vmem:[%s4 + $0x8] sm:$0xff]
    %v298 = vld [vmem:[%s4 + $0x10] sm:$0xff]
    %v299 = vld [vmem:[%s4 + $0x18] sm:$0xff]
    %s300 = scalar_lea.vmem %s4, 32
    %v301 = vld [vmem:[%s300] sm:$0xff]
    %v302 = vld [vmem:[%s300 + $0x8] sm:$0xff]
    %v303 = vld [vmem:[%s300 + $0x10] sm:$0xff]
    %v304 = vld [vmem:[%s300 + $0x18] sm:$0xff]
    %v305 = vsel %vm178, %v109, 0
    %v307 = vsel %vm178, %v110, 0
    %v309 = vsel %vm178, %v111, 0
    %v311 = vsel %vm178, %v112, 0
    %313 = vmatpush.msra.mxu0 0.0
    %314 = vmatpush.msra.mxu0 0.0
    %315 = vmatpush.msra.mxu0 0.0
    %316 = vmatpush.msra.mxu0 0.0
    %317 = vmatpush.msra.mxu0 0.0
    %318 = vmatpush.msra.mxu0 0.0
    %319 = vmatpush.msra.mxu0 0.0
    %320 = vmatpush.msra.mxu0 0.0
    %321 = vmatpush.msra.mxu0 0.0
    %322 = vmatpush.msra.mxu0 0.0
    %323 = vmatpush.msra.mxu0 0.0
    %324 = vmatpush.msra.mxu0 0.0
    %325 = vmatpush.msra.mxu0 %v304
    %326 = vmatpush.msra.mxu0 %v303
    %327 = vmatpush.msra.mxu0 %v302
    %328 = vmatpush.msra.mxu0 %v301
    %329 = vmatmul.f32.gmra.mxu0 %v305
    %v330 = vpop.f32.mrf.mxu0
    %v331 = vadd.f32 0.0, %v330
    %332 = vmatmul.f32.gmra.mxu0 %v307
    %v333 = vpop.f32.mrf.mxu0
    %v334 = vadd.f32 0.0, %v333
    %335 = vmatmul.f32.gmra.mxu0 %v309
    %v336 = vpop.f32.mrf.mxu0
    %v337 = vadd.f32 0.0, %v336
    %338 = vmatmul.f32.gmra.mxu0 %v311
    %v339 = vpop.f32.mrf.mxu0
    %v340 = vadd.f32 0.0, %v339
    %341 = vdwg.mxu0
    %v343 = vsel %vm178, %v141, 0
    %v345 = vsel %vm178, %v132, 0
    %v347 = vsel %vm178, %v134, 0
    %v349 = vsel %vm178, %v136, 0
    %351 = vmatpush.msra.mxu0 0.0
    %352 = vmatpush.msra.mxu0 0.0
    %353 = vmatpush.msra.mxu0 0.0
    %354 = vmatpush.msra.mxu0 0.0
    %355 = vmatpush.msra.mxu0 0.0
    %356 = vmatpush.msra.mxu0 0.0
    %357 = vmatpush.msra.mxu0 0.0
    %358 = vmatpush.msra.mxu0 0.0
    %359 = vmatpush.msra.mxu0 0.0
    %360 = vmatpush.msra.mxu0 0.0
    %361 = vmatpush.msra.mxu0 0.0
    %362 = vmatpush.msra.mxu0 0.0
    %363 = vmatpush.msra.mxu0 %v299
    %364 = vmatpush.msra.mxu0 %v298
    %365 = vmatpush.msra.mxu0 %v297
    %366 = vmatpush.msra.mxu0 %v296
    %367 = vmatmul.f32.gmra.mxu0 %v343
    %v368 = vpop.f32.mrf.mxu0
    %v369 = vadd.f32 %v331, %v368
    %370 = vmatmul.f32.gmra.mxu0 %v345
    %v371 = vpop.f32.mrf.mxu0
    %v372 = vadd.f32 %v334, %v371
    %373 = vmatmul.f32.gmra.mxu0 %v347
    %v374 = vpop.f32.mrf.mxu0
    %v375 = vadd.f32 %v337, %v374
    %376 = vmatmul.f32.gmra.mxu0 %v349
    %v377 = vpop.f32.mrf.mxu0
    %v378 = vadd.f32 %v340, %v377
    %379 = vdwg.mxu0
    %s380 = scalar_lea.vmem %s4, 64
    %v381 = vld [vmem:[%s380] sm:$0xff]
    %v382 = vld [vmem:[%s380 + $0x8] sm:$0xff]
    %v383 = vld [vmem:[%s380 + $0x10] sm:$0xff]
    %v384 = vld [vmem:[%s380 + $0x18] sm:$0xff]
    %v385 = vsel %vm178, %v145, 0
    %v387 = vsel %vm178, %v147, 0
    %v389 = vsel %vm178, %v149, 0
    %v392 = vsel %vm178, %v157, 0
    %394 = vmatpush.msra.mxu0 0.0
    %395 = vmatpush.msra.mxu0 0.0
    %396 = vmatpush.msra.mxu0 0.0
    %397 = vmatpush.msra.mxu0 0.0
    %398 = vmatpush.msra.mxu0 0.0
    %399 = vmatpush.msra.mxu0 0.0
    %400 = vmatpush.msra.mxu0 0.0
    %401 = vmatpush.msra.mxu0 0.0
    %402 = vmatpush.msra.mxu0 0.0
    %403 = vmatpush.msra.mxu0 0.0
    %404 = vmatpush.msra.mxu0 0.0
    %405 = vmatpush.msra.mxu0 0.0
    %406 = vmatpush.msra.mxu0 %v384
    %407 = vmatpush.msra.mxu0 %v383
    %408 = vmatpush.msra.mxu0 %v382
    %409 = vmatpush.msra.mxu0 %v381
    %410 = vmatmul.f32.gmra.mxu0 %v385
    %v411 = vpop.f32.mrf.mxu0
    %v412 = vadd.f32 0.0, %v411
    %413 = vmatmul.f32.gmra.mxu0 %v387
    %v414 = vpop.f32.mrf.mxu0
    %v415 = vadd.f32 0.0, %v414
    %416 = vmatmul.f32.gmra.mxu0 %v389
    %v417 = vpop.f32.mrf.mxu0
    %v418 = vadd.f32 0.0, %v417
    %419 = vmatmul.f32.gmra.mxu0 %v392
    %v420 = vpop.f32.mrf.mxu0
    %v421 = vadd.f32 0.0, %v420
    %422 = vdwg.mxu0
    %v423 = vadd.f32 %v369, %v412
    %v424 = vadd.f32 %v372, %v415
    %v425 = vadd.f32 %v375, %v418
    %v426 = vadd.f32 %v378, %v421
    %v427 = vld [vmem:[#allocation2] sm:$0x1]
    %v429 = vperm.slane %v427, 0
    %v431 = vadd.f32 %v423, %v429
    %v432 = vadd.f32 %v424, %v429
    %v433 = vadd.f32 %v425, %v429
    %v434 = vadd.f32 %v426, %v429
    %v435 = vxor.u32 %v431, 2147483648
    %v436 = vxor.u32 %v432, 2147483648
    %v437 = vxor.u32 %v433, 2147483648
    %v438 = vxor.u32 %v434, 2147483648
    %v439 = vmul.f32 %v435, 1.442695
    %v440 = vpow.pop %v439
    %v441 = vmul.f32 %v436, 1.442695
    %v442 = vpow.pop %v441
    %v443 = vmul.f32 %v437, 1.442695
    %v444 = vpow.pop %v443
    %v445 = vmul.f32 %v438, 1.442695
    %v446 = vpow.pop %v445
    %v447 = vadd.f32 %v440, 1.0
    %v448 = vadd.f32 %v442, 1.0
    %v449 = vadd.f32 %v444, 1.0
    %v450 = vadd.f32 %v446, 1.0
    %v451 = vrcp.pop %v447
    %v452 = vmul.f32 %v447, %v451
    %v453 = vsub.f32 1.0, %v452
    %v454 = vmul.f32 %v451, %v453
    %v455 = vadd.f32 %v451, %v454
    %vm456 = vweird.f32 %v447
    %vm457 = vweird.f32 %v451
    %vm458 = vmor %vm456, %vm457
    %v459 = vsel %vm458, %v451, %v455
    %v460 = vand.u32 2147483647, %v447
    %vm461 = vcmp.eq.f32.partialorder %v460, 8.507059e+37
    %v462 = vand.u32 %v447, 2147483648
    %v463 = vor.u32 1.1754944e-38, %v462
    %v464 = vsel %vm461, %v463, %v459
    %v465 = vmul.f32 1.0, %v464
    %v466 = vrcp.pop %v448
    %v467 = vmul.f32 %v448, %v466
    %v468 = vsub.f32 1.0, %v467
    %v469 = vmul.f32 %v466, %v468
    %v470 = vadd.f32 %v466, %v469
    %vm471 = vweird.f32 %v448
    %vm472 = vweird.f32 %v466
    %vm473 = vmor %vm471, %vm472
    %v474 = vsel %vm473, %v466, %v470
    %v475 = vand.u32 2147483647, %v448
    %vm476 = vcmp.eq.f32.partialorder %v475, 8.507059e+37
    %v477 = vand.u32 %v448, 2147483648
    %v478 = vor.u32 1.1754944e-38, %v477
    %v479 = vsel %vm476, %v478, %v474
    %v480 = vmul.f32 1.0, %v479
    %v481 = vrcp.pop %v449
    %v482 = vmul.f32 %v449, %v481
    %v483 = vsub.f32 1.0, %v482
    %v484 = vmul.f32 %v481, %v483
    %v485 = vadd.f32 %v481, %v484
    %vm486 = vweird.f32 %v449
    %vm487 = vweird.f32 %v481
    %vm488 = vmor %vm486, %vm487
    %v489 = vsel %vm488, %v481, %v485
    %v490 = vand.u32 2147483647, %v449
    %vm491 = vcmp.eq.f32.partialorder %v490, 8.507059e+37
    %v492 = vand.u32 %v449, 2147483648
    %v493 = vor.u32 1.1754944e-38, %v492
    %v494 = vsel %vm491, %v493, %v489
    %v495 = vmul.f32 1.0, %v494
    %v496 = vrcp.pop %v450
    %v497 = vmul.f32 %v450, %v496
    %v498 = vsub.f32 1.0, %v497
    %v499 = vmul.f32 %v496, %v498
    %v500 = vadd.f32 %v496, %v499
    %vm501 = vweird.f32 %v450
    %vm502 = vweird.f32 %v496
    %vm503 = vmor %vm501, %vm502
    %v504 = vsel %vm503, %v496, %v500
    %v505 = vand.u32 2147483647, %v450
    %vm506 = vcmp.eq.f32.partialorder %v505, 8.507059e+37
    %v507 = vand.u32 %v450, 2147483648
    %v508 = vor.u32 1.1754944e-38, %v507
    %v509 = vsel %vm506, %v508, %v504
    %v510 = vmul.f32 1.0, %v509
    %v511 = vmul.f32 %v109, %v250
    %v512 = vmul.f32 %v110, %v265
    %v513 = vmul.f32 %v111, %v280
    %v514 = vmul.f32 %v112, %v295
    %516 = vset.pattern.permute.xlu0 0
    %517 = vperm.xlu0 %516, %v465
    %v518 = vpop.permute.xlu0 %517
    %521 = vset.pattern.permute.xlu0 0
    %522 = vperm.xlu0 %521, %v480
    %v523 = vpop.permute.xlu0 %522
    %526 = vset.pattern.permute.xlu0 0
    %527 = vperm.xlu0 %526, %v495
    %v528 = vpop.permute.xlu0 %527
    %531 = vset.pattern.permute.xlu0 0
    %532 = vperm.xlu0 %531, %v510
    %v533 = vpop.permute.xlu0 %532
    %v535 = vmul.f32 %v511, %v518
    %v536 = vmul.f32 %v512, %v523
    %v537 = vmul.f32 %v513, %v528
    %v538 = vmul.f32 %v514, %v533
    %539 = vst.msk [vmem:[#allocation6] sm:$0xff] %vm178, %v535
    %540 = vst.msk [vmem:[#allocation6 + $0x8] sm:$0xff] %vm178, %v536
    %541 = vst.msk [vmem:[#allocation6 + $0x10] sm:$0xff] %vm178, %v537
    %542 = vst.msk [vmem:[#allocation6 + $0x18] sm:$0xff] %vm178, %v538
    // Predicated region
    $region34: #{tpu_custom_call.1} parent=1 // pred_check
      _
    $region35: #{tpu_custom_call.1} parent=1 // pred_check_branch
      %544 = sbr.rel (0) target = $region37
    $region36: #{tpu_custom_call.1} parent=1 // pred_region
      %546 = vsyncadd [#allocation5], 0
      %s547 = sshll.u32 [#allocation6], 4
      %s548 = int_to_ptr.vmem [resolvable:$true] %s547
      %s549 = sshll.u32 %s7, 4
      %s550 = int_to_ptr.hbm [resolvable:$true] %s549
      %555 = dma.vmem_to_hbm [thread:$0]  %s548, 512, %s550, [#allocation5], 128, 128, 8
    $region37: #{tpu_custom_call.1} parent=1 // pred_fallthru
      _
    // Predicated region
    $region38: #{tpu_custom_call.1} parent=1 // pred_check
      _
    $region39: #{tpu_custom_call.1} parent=1 // pred_check_branch
      %557 = sbr.rel (0) target = $region41
    $region40: #{tpu_custom_call.1} parent=1 // pred_region
      %559 = dma.done [#allocation5], 512
    $region41: #{tpu_custom_call.1} parent=1 // pred_fallthru
      _
    %560 = vsyncpa [#allocation4], 1
    %561 = vsyncpa [#allocation5], 1

</llo_original>
